<compile_context>
chip_gen: v6e
topology: v6e:2x2x1
jax: 0.10.0
libtpu: 0.0.40
codegen_flags: <defaults>
</compile_context>

<pallas_src>
import jax
import jax.numpy as jnp
from jax.experimental import pallas as pl
from jax.experimental.pallas import tpu as pltpu

IGNORE_INDEX = -100


def _ce_kernel(x_ref, label_ref, out_ref, sum_ref, cnt_ref):
    # x_ref:     (TILE_N, C) logits, native dtype (VMEM)
    # label_ref: (TILE_N, 1) int32 labels (VMEM)
    # out_ref:   (1, 1) float32 scalar loss (VMEM)
    # sum_ref/cnt_ref: (1, 1) float32 running accumulators (VMEM scratch)
    i = pl.program_id(0)

    @pl.when(i == 0)
    def _():
        sum_ref[...] = jnp.zeros_like(sum_ref)
        cnt_ref[...] = jnp.zeros_like(cnt_ref)

    x = x_ref[...].astype(jnp.float32)      # upcast in-register (bf16 DMA stays bf16)
    labels = label_ref[...]                 # (TILE_N, 1) int32
    tn, c = x.shape

    # Numerically stable log-sum-exp per row.
    row_max = jnp.max(x, axis=1, keepdims=True)                            # (TILE_N, 1)
    lse = row_max + jnp.log(
        jnp.sum(jnp.exp(x - row_max), axis=1, keepdims=True))              # (TILE_N, 1)

    # x[i, labels[i]] via masked select (cheaper than one-hot multiply).
    class_ids = jax.lax.broadcasted_iota(jnp.int32, (tn, c), 1)            # (TILE_N, C)
    x_at_label = jnp.sum(jnp.where(class_ids == labels, x, 0.0),
                         axis=1, keepdims=True)                            # (TILE_N, 1)

    per_row = lse - x_at_label                                             # NLL per row
    valid = labels != IGNORE_INDEX                                         # (TILE_N, 1)
    per_row = jnp.where(valid, per_row, 0.0)

    sum_ref[...] += jnp.sum(per_row, axis=(0, 1), keepdims=True)
    cnt_ref[...] += jnp.sum(valid.astype(jnp.float32), axis=(0, 1), keepdims=True)

    @pl.when(i == pl.num_programs(0) - 1)
    def _():
        # Single finalize: divide once, store once. (NaN if all rows ignored,
        # matching PyTorch's behavior.)
        out_ref[...] = sum_ref[...] / cnt_ref[...]


def search_loss(x, label, *, tile_n=None):
    """Pallas implementation of SearchLoss.forward(x, label).

    x: float array whose squeeze() gives (N, C) logits (any float dtype).
    label: (N,) integer class ids (may contain IGNORE_INDEX).
    Returns scalar float32 mean cross-entropy over non-ignored rows.
    """
    x2 = jnp.squeeze(x)                     # matches torch x.squeeze()
    assert x2.ndim == 2, "squeezed logits must be (N, C)"
    n, c = x2.shape
    label2 = label.astype(jnp.int32).reshape(n, 1)

    itemsize = jnp.dtype(x2.dtype).itemsize

    if tile_n is None:
        # Target ~4 MiB per logits tile (x2 with double buffering ~8 MiB),
        # cap at 512 rows, keep a multiple of 8 sublanes.
        budget = 4 * 1024 * 1024
        tile_n = max(8, min(512, budget // max(1, c * itemsize)))
        tile_n = max(8, (tile_n // 8) * 8)
    # Never tile wider than the (8-padded) row count.
    tile_n = min(tile_n, max(8, ((n + 7) // 8) * 8))

    # Pad rows so the grid tiles evenly; padded rows get IGNORE_INDEX labels
    # (and zero logits) so they contribute to neither total nor count.
    n_pad = pl.cdiv(n, tile_n) * tile_n
    if n_pad != n:
        x2 = jnp.pad(x2, ((0, n_pad - n), (0, 0)))
        label2 = jnp.pad(label2, ((0, n_pad - n), (0, 0)),
                         constant_values=IGNORE_INDEX)

    grid = (n_pad // tile_n,)

    # Scoped VMEM: double-buffered logits + labels + small scratch + headroom.
    needed = 2 * tile_n * c * itemsize + 2 * tile_n * 4
    vmem_limit = int(max(16 * 2**20, min(48 * 2**20, needed + 4 * 2**20)))

    out = pl.pallas_call(
        _ce_kernel,
        out_shape=jax.ShapeDtypeStruct((1, 1), jnp.float32),
        grid=grid,
        in_specs=[
            pl.BlockSpec((tile_n, c), lambda i: (i, 0)),
            pl.BlockSpec((tile_n, 1), lambda i: (i, 0)),
        ],
        out_specs=pl.BlockSpec((1, 1), lambda i: (0, 0)),
        scratch_shapes=[
            pltpu.VMEM((1, 1), jnp.float32),   # running sum of NLL
            pltpu.VMEM((1, 1), jnp.float32),   # running count of valid rows
        ],
        compiler_params=pltpu.CompilerParams(
            dimension_semantics=("arbitrary",),  # accumulating row axis
            vmem_limit_bytes=vmem_limit,
        ),
    )(x2, label2)

    return out[0, 0]


def _reference(x, label):
    x2 = jnp.squeeze(x)
    logp = jax.nn.log_softmax(x2.astype(jnp.float32), axis=-1)
    valid = label != IGNORE_INDEX
    safe_label = jnp.where(valid, label, 0)
    nll = -jnp.take_along_axis(logp, safe_label[:, None], axis=1)[:, 0]
    return jnp.sum(jnp.where(valid, nll, 0.0)) / jnp.sum(valid.astype(jnp.float32))


if __name__ == "__main__":
    key = jax.random.PRNGKey(0)
    kx, kl, kx2, kl2 = jax.random.split(key, 4)

    # Case 1: small, single tile; raw input has a singleton dim that squeeze() removes.
    N, C = 8, 32
    x = jax.random.normal(kx, (N, 1, C), dtype=jnp.float32)
    label = jax.random.randint(kl, (N,), 0, C, dtype=jnp.int32)
    label = label.at[3].set(IGNORE_INDEX)      # exercise ignore_index handling

    loss = search_loss(x, label)
    jax.block_until_ready(loss)
    ref = _reference(x, label)
    assert jnp.allclose(loss, ref, rtol=1e-5, atol=1e-5), (loss, ref)

    # Case 2: multi-tile with ragged tail (N=40, forced tile_n=16 -> 3 grid steps,
    # last tile partially padded) to exercise accumulation + tail masking.
    N2, C2 = 40, 128
    x_b = jax.random.normal(kx2, (N2, 1, C2), dtype=jnp.float32)
    label_b = jax.random.randint(kl2, (N2,), 0, C2, dtype=jnp.int32)
    label_b = label_b.at[0].set(IGNORE_INDEX)
    label_b = label_b.at[37].set(IGNORE_INDEX)

    loss_b = search_loss(x_b, label_b, tile_n=16)
    jax.block_until_ready(loss_b)
    ref_b = _reference(x_b, label_b)
    assert jnp.allclose(loss_b, ref_b, rtol=1e-5, atol=1e-5), (loss_b, ref_b)

    print("KERNEL_OK")
</pallas_src>

<mosaic_0001>
module attributes {stable_mosaic.version = 11 : i64} {
  func.func @_ce_kernel(%arg0: i32, %arg1: memref<8x32xf32, #tpu.memory_space<vmem>>, %arg2: memref<8x1xi32, #tpu.memory_space<vmem>>, %arg3: memref<1x1xf32, #tpu.memory_space<vmem>>, %arg4: memref<1x1xf32, #tpu.memory_space<vmem>>, %arg5: memref<1x1xf32, #tpu.memory_space<vmem>>) attributes {dimension_semantics = [#tpu.dimension_semantics<arbitrary>], iteration_bounds = array<i64: 1>, scalar_prefetch = 0 : i64, scratch_operands = 2 : i64, tpu.core_type = #tpu.core_type<tc>, window_params = [{transform_indices = @transform_0, window_bounds = array<i64: 8, 32>}, {transform_indices = @transform_1, window_bounds = array<i64: 8, 1>}, {pipeline_mode = #tpu.pipeline_mode<synchronous>, transform_indices = @transform_2, window_bounds = array<i64: 1, 1>}]} {
    %c0_i32 = arith.constant 0 : i32
    %0 = arith.cmpi eq, %arg0, %c0_i32 : i32
    %1 = arith.extui %0 : i1 to i32
    %c0_i32_0 = arith.constant 0 : i32
    %2 = arith.cmpi ne, %1, %c0_i32_0 : i32
    scf.if %2 {
      %cst_20 = arith.constant 0.000000e+00 : f32
      %47 = vector.broadcast %cst_20 : f32 to vector<1x1xf32>
      %c0_21 = arith.constant 0 : index
      %c0_22 = arith.constant 0 : index
      %48 = vector.load %arg4[%c0_21, %c0_22] : memref<1x1xf32, #tpu.memory_space<vmem>>, vector<1x1xf32>
      tpu.vector_store %arg4[%c0_21, %c0_22], %47 {strides = array<i32>} : memref<1x1xf32, #tpu.memory_space<vmem>>, vector<1x1xf32>,
      %cst_23 = arith.constant 0.000000e+00 : f32
      %49 = vector.broadcast %cst_23 : f32 to vector<1x1xf32>
      %c0_24 = arith.constant 0 : index
      %c0_25 = arith.constant 0 : index
      %50 = vector.load %arg5[%c0_24, %c0_25] : memref<1x1xf32, #tpu.memory_space<vmem>>, vector<1x1xf32>
      tpu.vector_store %arg5[%c0_24, %c0_25], %49 {strides = array<i32>} : memref<1x1xf32, #tpu.memory_space<vmem>>, vector<1x1xf32>,
    } else {
    }
    %c0 = arith.constant 0 : index
    %c0_1 = arith.constant 0 : index
    %3 = vector.load %arg1[%c0, %c0_1] : memref<8x32xf32, #tpu.memory_space<vmem>>, vector<8x32xf32>
    %c0_2 = arith.constant 0 : index
    %c0_3 = arith.constant 0 : index
    %4 = vector.load %arg2[%c0_2, %c0_3] : memref<8x1xi32, #tpu.memory_space<vmem>>, vector<8x1xi32>
    %cst = arith.constant dense<0xFF800000> : vector<8xf32>
    %5 = vector.multi_reduction <maximumf>, %3, %cst [1] : vector<8x32xf32> to vector<8xf32>
    %6 = vector.shape_cast %5 : vector<8xf32> to vector<8x1xf32>
    %7 = vector.broadcast %6 : vector<8x1xf32> to vector<8x32xf32>
    %8 = arith.subf %3, %7 : vector<8x32xf32>
    %9 = math.exp %8 : vector<8x32xf32>
    %cst_4 = arith.constant dense<0.000000e+00> : vector<8xf32>
    %10 = vector.multi_reduction <add>, %9, %cst_4 [1] : vector<8x32xf32> to vector<8xf32>
    %11 = vector.shape_cast %10 : vector<8xf32> to vector<8x1xf32>
    %12 = math.log %11 : vector<8x1xf32>
    %13 = arith.addf %6, %12 : vector<8x1xf32>
    %14 = tpu.iota {dimensions = array<i32: 1>} : vector<8x32xi32>
    %15 = vector.broadcast %4 : vector<8x1xi32> to vector<8x32xi32>
    %16 = arith.cmpi eq, %14, %15 : vector<8x32xi32>
    %cst_5 = arith.constant 0.000000e+00 : f32
    %17 = vector.broadcast %cst_5 : f32 to vector<8x32xf32>
    %18 = arith.select %16, %3, %17 : vector<8x32xi1>, vector<8x32xf32>
    %cst_6 = arith.constant dense<0.000000e+00> : vector<8xf32>
    %19 = vector.multi_reduction <add>, %18, %cst_6 [1] : vector<8x32xf32> to vector<8xf32>
    %20 = vector.shape_cast %19 : vector<8xf32> to vector<8x1xf32>
    %21 = arith.subf %13, %20 : vector<8x1xf32>
    %c-100_i32 = arith.constant -100 : i32
    %22 = vector.broadcast %c-100_i32 : i32 to vector<8x1xi32>
    %23 = arith.cmpi ne, %4, %22 : vector<8x1xi32>
    %cst_7 = arith.constant 0.000000e+00 : f32
    %24 = vector.broadcast %cst_7 : f32 to vector<8x1xf32>
    %25 = arith.select %23, %21, %24 : vector<8x1xi1>, vector<8x1xf32>
    %c0_8 = arith.constant 0 : index
    %c0_9 = arith.constant 0 : index
    %26 = vector.load %arg4[%c0_8, %c0_9] : memref<1x1xf32, #tpu.memory_space<vmem>>, vector<1x1xf32>
    %27 = vector.shape_cast %25 : vector<8x1xf32> to vector<1x8x1xf32>
    %cst_10 = arith.constant dense<0.000000e+00> : vector<1xf32>
    %28 = vector.multi_reduction <add>, %27, %cst_10 [1, 2] : vector<1x8x1xf32> to vector<1xf32>
    %29 = vector.shape_cast %28 : vector<1xf32> to vector<1x1x1xf32>
    %30 = vector.extract %29[0, 0, 0] : f32 from vector<1x1x1xf32>
    %31 = vector.broadcast %30 : f32 to vector<1x1xf32>
    %32 = arith.addf %26, %31 : vector<1x1xf32>
    %c0_11 = arith.constant 0 : index
    %c0_12 = arith.constant 0 : index
    %33 = vector.load %arg4[%c0_11, %c0_12] : memref<1x1xf32, #tpu.memory_space<vmem>>, vector<1x1xf32>
    tpu.vector_store %arg4[%c0_11, %c0_12], %32 {strides = array<i32>} : memref<1x1xf32, #tpu.memory_space<vmem>>, vector<1x1xf32>,
    %c0_13 = arith.constant 0 : index
    %c0_14 = arith.constant 0 : index
    %34 = vector.load %arg5[%c0_13, %c0_14] : memref<1x1xf32, #tpu.memory_space<vmem>>, vector<1x1xf32>
    %35 = arith.extui %23 : vector<8x1xi1> to vector<8x1xi32>
    %36 = arith.sitofp %35 : vector<8x1xi32> to vector<8x1xf32>
    %37 = vector.shape_cast %36 : vector<8x1xf32> to vector<1x8x1xf32>
    %cst_15 = arith.constant dense<0.000000e+00> : vector<1xf32>
    %38 = vector.multi_reduction <add>, %37, %cst_15 [1, 2] : vector<1x8x1xf32> to vector<1xf32>
    %39 = vector.shape_cast %38 : vector<1xf32> to vector<1x1x1xf32>
    %40 = vector.extract %39[0, 0, 0] : f32 from vector<1x1x1xf32>
    %41 = vector.broadcast %40 : f32 to vector<1x1xf32>
    %42 = arith.addf %34, %41 : vector<1x1xf32>
    %c0_16 = arith.constant 0 : index
    %c0_17 = arith.constant 0 : index
    %43 = vector.load %arg5[%c0_16, %c0_17] : memref<1x1xf32, #tpu.memory_space<vmem>>, vector<1x1xf32>
    tpu.vector_store %arg5[%c0_16, %c0_17], %42 {strides = array<i32>} : memref<1x1xf32, #tpu.memory_space<vmem>>, vector<1x1xf32>,
    %c0_i32_18 = arith.constant 0 : i32
    %44 = arith.cmpi eq, %arg0, %c0_i32_18 : i32
    %45 = arith.extui %44 : i1 to i32
    %c0_i32_19 = arith.constant 0 : i32
    %46 = arith.cmpi ne, %45, %c0_i32_19 : i32
    scf.if %46 {
      %c0_20 = arith.constant 0 : index
      %c0_21 = arith.constant 0 : index
      %47 = vector.load %arg4[%c0_20, %c0_21] : memref<1x1xf32, #tpu.memory_space<vmem>>, vector<1x1xf32>
      %c0_22 = arith.constant 0 : index
      %c0_23 = arith.constant 0 : index
      %48 = vector.load %arg5[%c0_22, %c0_23] : memref<1x1xf32, #tpu.memory_space<vmem>>, vector<1x1xf32>
      %49 = arith.divf %47, %48 : vector<1x1xf32>
      %c0_24 = arith.constant 0 : index
      %c0_25 = arith.constant 0 : index
      %50 = vector.load %arg3[%c0_24, %c0_25] : memref<1x1xf32, #tpu.memory_space<vmem>>, vector<1x1xf32>
      tpu.vector_store %arg3[%c0_24, %c0_25], %49 {strides = array<i32>} : memref<1x1xf32, #tpu.memory_space<vmem>>, vector<1x1xf32>,
    } else {
    }
    return
  }
  func.func @transform_0(%arg0: i32) -> (i32, i32) {
    %c0_i32 = arith.constant 0 : i32
    %c0_i32_0 = arith.constant 0 : i32
    return %arg0, %c0_i32 : i32, i32
  }
  func.func @transform_1(%arg0: i32) -> (i32, i32) {
    %c0_i32 = arith.constant 0 : i32
    %c0_i32_0 = arith.constant 0 : i32
    return %arg0, %c0_i32 : i32, i32
  }
  func.func @transform_2(%arg0: i32) -> (i32, i32) {
    %c0_i32 = arith.constant 0 : i32
    %c0_i32_0 = arith.constant 0 : i32
    %c0_i32_1 = arith.constant 0 : i32
    return %c0_i32, %c0_i32_0 : i32, i32
  }
}

</mosaic_0001>

<llo_original>
// kernel: tpu_custom_call.1
$region0: #{tpu_custom_call.1}
  #allocation0 [shape = 'u32[]', space=smem, size = 0x4, offset = 0x4, fixed_abs, tag = 'smem constant byte address 0x4 - core index']
  #allocation1 [shape = 'u32[144,128]{1,0:T(1,128)}', space=vmem, size = 0x12000, scoped, tag = 'internal scratch']
  #allocation2 [shape = 'f32[1,1]{1,0:T(1,128)}', space=vmem, size = 0x200, scoped, tag = 'scratch operand']
  #allocation3 [shape = 'f32[1,1]{1,0:T(1,128)}', space=vmem, size = 0x200, scoped, tag = 'scratch operand']
  %s0 = inlined_call_operand.vmem [shape: f32[8,32], index: 0, kind: input, shape index: {}]
  %s1 = inlined_call_operand.vmem [shape: s32[8,1], index: 1, kind: input, shape index: {}]
  %s2 = inlined_call_operand.hbm [shape: f32[1,1], index: 2, kind: output, shape index: {}]
  %s3 = sld [smem:[#allocation0]]
  $region26: #{tpu_custom_call.1} parent=0
    _
  %s5 = ssub.s32 1, %s3
  %s6 = scalar_select 0, %s5, %s3
  $region1: #{tpu_custom_call.1} parent=0
    #allocation4 [shape = 'u8[512]{0}', space=vmem, size = 0x400, scoped, tag = 'output window, operand 0, single buffered']
    #allocation5 [shape = 's32[1]{0}', space=sflag, size = 0x4, scoped, tag = 'scoped memory for tpu_custom_call.1']
    %7 = vsyncpa [#allocation5], 0
    // Predicated region
    $region2: #{tpu_custom_call.1} parent=1 // pred_check
      _
    $region3: #{tpu_custom_call.1} parent=1 // pred_check_branch
      %9 = sbr.rel (0) target = $region5
    $region4: #{tpu_custom_call.1} parent=1 // pred_region
      _
    $region5: #{tpu_custom_call.1} parent=1 // pred_fallthru
      _
    // Predicated region
    $region6: #{tpu_custom_call.1} parent=1 // pred_check
      _
    $region7: #{tpu_custom_call.1} parent=1 // pred_check_branch
      %11 = sbr.rel (0) target = $region9
    $region8: #{tpu_custom_call.1} parent=1 // pred_region
      _
    $region9: #{tpu_custom_call.1} parent=1 // pred_fallthru
      _
    %p12 = scmp.eq.s32.totalorder 0, 0
    // Predicated region
    $region10: #{tpu_custom_call.1} parent=1 // pred_check
      %p13 = pneg %p12
    $region11: #{tpu_custom_call.1} parent=1 // pred_check_branch
      %15 = sbr.rel (%p13) target = $region13
    $region12: #{tpu_custom_call.1} parent=1 // pred_region
      %vm16 = vcmask 0
      %17 = vst.msk [vmem:[#allocation2] sm:$0x1] %vm16, 0.0
      %18 = vst.msk [vmem:[#allocation3] sm:$0x1] %vm16, 0.0
    $region13: #{tpu_custom_call.1} parent=1 // pred_fallthru
      _
    %v19 = vld [vmem:[%s0] sm:$0xff]
    %v20 = vld [vmem:[%s1] sm:$0xff]
    %vm21 = vcmask 261120
    %v22 = vsel %vm21, %v19, -inf
    %23 = vmax.xlane.f32.xlu0 %v22
    %v24 = vpop.xlane.xlu0 %23
    %v25 = vsub.f32 %v19, %v24
    %v26 = vmul.f32 %v25, 1.442695
    %v27 = vpow.pop %v26
    %v28 = vsel %vm21, %v27, 0.0
    %29 = vadd.xlane.f32.xlu0 %v28
    %v30 = vpop.xlane.xlu0 %29
    %v31 = vlog2.pop %v30
    %v32 = vmul.f32 %v31, 0.6931472
    %v33 = vadd.f32 %v24, %v32
    %v34 = vlaneseq
    %v35 = vand.u32 %v34, 127
    %36 = vset.pattern.permute.xlu0 0
    %37 = vperm.xlu0 %36, %v20
    %v38 = vpop.permute.xlu0 %37
    %vm39 = vcmp.eq.s32.totalorder %v35, %v38
    %v40 = vsel %vm39, %v19, 0.0
    %v41 = vsel %vm21, %v40, 0.0
    %42 = vadd.xlane.f32.xlu0 %v41
    %v43 = vpop.xlane.xlu0 %42
    %v44 = vsub.f32 %v33, %v43
    %vm45 = vcmp.ne.s32.totalorder %v20, 4294967196
    %v46 = vsel %vm45, %v44, 0.0
    %v47 = vld [vmem:[#allocation2] sm:$0x1]
    %vm48 = vcmask 7168
    %v49 = vsel %vm48, %v46, 0.0
    %50 = vadd.xlane.f32.xlu0 %v49
    %v51 = vpop.xlane.xlu0 %50
    %v52 = vrot.slane %v51, 4
    %v53 = vadd.f32 %v51, %v52
    %v54 = vrot.slane %v53, 2
    %v55 = vadd.f32 %v53, %v54
    %v56 = vrot.slane %v55, 1
    %v57 = vadd.f32 %v55, %v56
    %s58 = vtos %v57
    %v59 = vstv %s58
    %v60 = vadd.f32 %v47, %v59
    %vm61 = vcmask 0
    %62 = vst.msk [vmem:[#allocation2] sm:$0x1] %vm61, %v60
    %v63 = vld [vmem:[#allocation3] sm:$0x1]
    %v64 = vsel %vm45, 1, 0
    %v65 = vcvt.s32.f32 %v64
    %v66 = vsel %vm48, %v65, 0.0
    %67 = vadd.xlane.f32.xlu0 %v66
    %v68 = vpop.xlane.xlu0 %67
    %v69 = vrot.slane %v68, 4
    %v70 = vadd.f32 %v68, %v69
    %v71 = vrot.slane %v70, 2
    %v72 = vadd.f32 %v70, %v71
    %v73 = vrot.slane %v72, 1
    %v74 = vadd.f32 %v72, %v73
    %s75 = vtos %v74
    %v76 = vstv %s75
    %v77 = vadd.f32 %v63, %v76
    %78 = vst.msk [vmem:[#allocation3] sm:$0x1] %vm61, %v77
    // Predicated region
    $region14: #{tpu_custom_call.1} parent=1 // pred_check
      %p79 = pneg %p12
    $region15: #{tpu_custom_call.1} parent=1 // pred_check_branch
      %81 = sbr.rel (%p79) target = $region17
    $region16: #{tpu_custom_call.1} parent=1 // pred_region
      %v82 = vld [vmem:[#allocation2] sm:$0x1]
      %v83 = vld [vmem:[#allocation3] sm:$0x1]
      %v84 = vrcp.pop %v83
      %v85 = vmul.f32 %v82, %v84
      %86 = vst.msk [vmem:[#allocation4] sm:$0x1] %vm61, %v85
    $region17: #{tpu_custom_call.1} parent=1 // pred_fallthru
      _
    // Predicated region
    $region18: #{tpu_custom_call.1} parent=1 // pred_check
      _
    $region19: #{tpu_custom_call.1} parent=1 // pred_check_branch
      %88 = sbr.rel (0) target = $region21
    $region20: #{tpu_custom_call.1} parent=1 // pred_region
      %s90 = ssub.s32 16, 16
      %91 = vsyncadd [#allocation5], %s90
      %s93 = sshll.u32 [#allocation4], 4
      %s94 = int_to_ptr.vmem [resolvable:$true] %s93
      %96 = dma.vmem_to_hbm [thread:$0]  %s94, 16, %s2, [#allocation5]
    $region21: #{tpu_custom_call.1} parent=1 // pred_fallthru
      _
    // Predicated region
    $region22: #{tpu_custom_call.1} parent=1 // pred_check
      _
    $region23: #{tpu_custom_call.1} parent=1 // pred_check_branch
      %98 = sbr.rel (0) target = $region25
    $region24: #{tpu_custom_call.1} parent=1 // pred_region
      %99 = dma.done [#allocation5], 16
    $region25: #{tpu_custom_call.1} parent=1 // pred_fallthru
      _
    %100 = vsyncpa [#allocation5], 1

</llo_original>
